<compile_context>
chip_gen: v7x
topology: tpu7x:2x2x1
jax: 0.10.0
libtpu: 0.0.40
codegen_flags: <defaults>
</compile_context>

<pallas_src>
import functools

import jax
import jax.numpy as jnp
from jax.experimental import pallas as pl
from jax.experimental.pallas import tpu as pltpu


def _round_up(n, m):
    return ((n + m - 1) // m) * m


# ------------------------- fused Pallas kernel -------------------------

def _expand_ln_kernel(x_ref, w_ref, g_ref, b_ref, o_ref, *, c, eps):
    # x_ref: (tm, dim) bf16, w_ref: (dim, 4*c) bf16,
    # g_ref/b_ref: (1, 4*c) f32 (gamma/beta tiled 4x), o_ref: (tm, 4*c)
    y = jnp.dot(x_ref[...], w_ref[...], preferred_element_type=jnp.float32)

    # Grouped LayerNorm: the later pixel-shuffle maps each contiguous group of c
    # channels of this row to one output token, so LayerNorm(dim//2) applied after the
    # rearrange == per-group LayerNorm applied here (it commutes with the permutation).
    parts = []
    for grp in range(4):
        seg = y[:, grp * c:(grp + 1) * c]
        mean = jnp.mean(seg, axis=-1, keepdims=True)
        cen = seg - mean
        var = jnp.mean(cen * cen, axis=-1, keepdims=True)
        parts.append(cen * jax.lax.rsqrt(var + eps))
    yn = jnp.concatenate(parts, axis=-1)                      # (tm, 4*c)

    o_ref[...] = (yn * g_ref[...] + b_ref[...]).astype(o_ref.dtype)


# ------------------------- wrapper -------------------------

def expand_layernorm(x2d, w_t, gamma, beta, *, tm=256, eps=1e-5,
                     compute_dtype=jnp.bfloat16, out_dtype=None):
    """Fused (x2d @ w_t) followed by LayerNorm over each contiguous dim//2 group.

    x2d:   (M, dim)
    w_t:   (dim, 2*dim)   transposed nn.Linear weight (bias=False)
    gamma, beta: (dim//2,)
    returns (M, 2*dim) with every contiguous group of dim//2 channels layer-normalized.
    """
    M, D = x2d.shape
    D2 = w_t.shape[1]
    assert D2 == 2 * D
    c = D2 // 4
    assert gamma.shape == (c,) and beta.shape == (c,)
    out_dtype = out_dtype if out_dtype is not None else x2d.dtype

    # Row tile: keep it large, clamp to the (sublane-rounded) problem size and pad so
    # any (B, H, W, dim) works without shrinking the tile.
    tm = min(tm, _round_up(M, 8))
    m_pad = _round_up(M, tm)
    grid_m = m_pad // tm

    x_in = x2d.astype(compute_dtype)
    if m_pad != M:
        x_in = jnp.pad(x_in, ((0, m_pad - M), (0, 0)))
    w_in = w_t.astype(compute_dtype)

    # Pre-tile gamma/beta to (1, 2*dim) f32: epilogue is a plain lane-aligned mul/add.
    g = jnp.tile(gamma.astype(jnp.float32), 4).reshape(1, D2)
    b = jnp.tile(beta.astype(jnp.float32), 4).reshape(1, D2)

    # Rough VMEM budget: double-buffered x/w/out blocks + f32 epilogue temporaries.
    # Cap at 48 MiB so it is safe on v7x (64 MiB physical) and v5e/v6e.
    bpe = jnp.dtype(compute_dtype).itemsize
    est = 2 * (tm * D * bpe + D * D2 * bpe + 2 * D2 * 4
               + tm * D2 * jnp.dtype(out_dtype).itemsize) + 6 * tm * D2 * 4
    vmem_limit = int(min(max(2 * est, 16 * 1024 * 1024), 48 * 1024 * 1024))
    # TODO(synk): for very large dim (f32-equivalent weight block >> VMEM), add an
    # N-axis grid dimension to tile the (dim, 2*dim) weight instead of keeping it whole.

    kernel = functools.partial(_expand_ln_kernel, c=c, eps=eps)
    out = pl.pallas_call(
        kernel,
        out_shape=jax.ShapeDtypeStruct((m_pad, D2), out_dtype),
        grid_spec=pltpu.PrefetchScalarGridSpec(
            num_scalar_prefetch=0,
            grid=(grid_m,),
            in_specs=[
                pl.BlockSpec((tm, D), lambda i: (i, 0)),
                pl.BlockSpec((D, D2), lambda i: (0, 0)),
                pl.BlockSpec((1, D2), lambda i: (0, 0)),
                pl.BlockSpec((1, D2), lambda i: (0, 0)),
            ],
            out_specs=pl.BlockSpec((tm, D2), lambda i: (i, 0)),
        ),
        compiler_params=pltpu.CompilerParams(
            dimension_semantics=("parallel",),
            vmem_limit_bytes=vmem_limit,
        ),
    )(x_in, w_in, g, b)

    if m_pad != M:
        out = out[:M]
    return out


def upsample_forward(x, params, input_resolution, dim, *, compute_dtype=jnp.bfloat16):
    """Equivalent of Upsample.forward. x: (B, L, dim) -> (B, 4*L, dim//2)."""
    H, W = input_resolution
    B, L, D = x.shape
    assert L == H * W, "input feature has wrong size"
    assert D == dim

    x2d = x.reshape(B * L, D)
    y2d = expand_layernorm(x2d, params["expand_w_t"], params["ln_gamma"],
                           params["ln_beta"], compute_dtype=compute_dtype)  # (B*L, 2*dim)
    C = 2 * D
    c = C // 4

    # rearrange 'b h w (p1 p2 c) -> b (h p1) (w p2) c' -- pure layout plumbing (XLA copy).
    # TODO(synk): if this transpose dominates profiles, emit the fused output in bf16 to
    # halve the copy's HBM traffic (changes the module's output dtype).
    y = y2d.reshape(B, H, W, 2, 2, c)
    y = jnp.transpose(y, (0, 1, 3, 2, 4, 5))                  # (B, H, p1, W, p2, c)
    y = y.reshape(B, 4 * L, c)
    return y


def init_params(key, dim, dtype=jnp.float32, compute_dtype=jnp.bfloat16):
    # nn.Linear(dim, 2*dim, bias=False): weight (2*dim, dim); y = x @ W.T.
    # Store transposed weight (dim, 2*dim), pre-cast to the MXU compute dtype.
    bound = 1.0 / (dim ** 0.5)
    w = jax.random.uniform(key, (2 * dim, dim), dtype=dtype, minval=-bound, maxval=bound)
    return {
        "expand_w_t": w.T.astype(compute_dtype),
        # nn.LayerNorm(dim // 2) default init: weight=1, bias=0
        "ln_gamma": jnp.ones((dim // 2,), dtype=dtype),
        "ln_beta": jnp.zeros((dim // 2,), dtype=dtype),
    }


def _reference_forward(x, params, input_resolution, dim, *, compute_dtype=jnp.bfloat16):
    # Pure-JAX reference: matmul at compute_dtype (f32 accumulation), LN in f32.
    H, W = input_resolution
    B, L, D = x.shape
    y = jnp.einsum("blk,kc->blc",
                   x.astype(compute_dtype),
                   params["expand_w_t"].astype(compute_dtype),
                   preferred_element_type=jnp.float32)
    C = 2 * D
    c = C // 4
    y = y.reshape(B, H, W, 2, 2, c)
    y = jnp.transpose(y, (0, 1, 3, 2, 4, 5)).reshape(B, 4 * L, c)
    mean = jnp.mean(y, axis=-1, keepdims=True)
    var = jnp.mean((y - mean) ** 2, axis=-1, keepdims=True)
    y = (y - mean) * jax.lax.rsqrt(var + 1e-5)
    y = y * params["ln_gamma"].astype(jnp.float32) + params["ln_beta"].astype(jnp.float32)
    return y.astype(x.dtype)


if __name__ == "__main__":
    B = 2
    H = W = 8
    dim = 32
    L = H * W

    key = jax.random.PRNGKey(0)
    kx, kw = jax.random.split(key)
    x = jax.random.normal(kx, (B, L, dim), dtype=jnp.float32)
    params = init_params(kw, dim)

    out = upsample_forward(x, params, (H, W), dim)
    out = jax.block_until_ready(out)
    assert out.shape == (B, 4 * L, dim // 2), out.shape

    # Matched-precision reference (same bf16 MXU inputs, f32 accumulation / f32 LN).
    ref = _reference_forward(x, params, (H, W), dim)
    assert jnp.allclose(out, ref, atol=2e-3, rtol=2e-3), "mismatch vs matched-precision ref"

    # Loose sanity check against an all-f32 matmul reference (bf16 inputs are the only diff).
    ref32 = _reference_forward(x, params, (H, W), dim, compute_dtype=jnp.float32)
    assert jnp.allclose(out, ref32, atol=5e-2, rtol=5e-2), "mismatch vs f32 reference"

    print("KERNEL_OK")
</pallas_src>

<mosaic_0001>
module attributes {stable_mosaic.version = 11 : i64} {
  func.func @_expand_ln_kernel(%arg0: i32, %arg1: memref<128x32xbf16, #tpu.memory_space<vmem>>, %arg2: memref<32x64xbf16, #tpu.memory_space<vmem>>, %arg3: memref<1x64xf32, #tpu.memory_space<vmem>>, %arg4: memref<1x64xf32, #tpu.memory_space<vmem>>, %arg5: memref<128x64xf32, #tpu.memory_space<vmem>>) attributes {dimension_semantics = [#tpu.dimension_semantics<parallel>], iteration_bounds = array<i64: 1>, scalar_prefetch = 0 : i64, scratch_operands = 0 : i64, tpu.core_type = #tpu.core_type<tc>, window_params = [{transform_indices = @transform_0, window_bounds = array<i64: 128, 32>}, {pipeline_mode = #tpu.pipeline_mode<synchronous>, transform_indices = @transform_1, window_bounds = array<i64: 32, 64>}, {pipeline_mode = #tpu.pipeline_mode<synchronous>, transform_indices = @transform_2, window_bounds = array<i64: 1, 64>}, {pipeline_mode = #tpu.pipeline_mode<synchronous>, transform_indices = @transform_3, window_bounds = array<i64: 1, 64>}, {transform_indices = @transform_4, window_bounds = array<i64: 128, 64>}]} {
    %c0 = arith.constant 0 : index
    %c0_0 = arith.constant 0 : index
    %0 = vector.load %arg1[%c0, %c0_0] : memref<128x32xbf16, #tpu.memory_space<vmem>>, vector<128x32xbf16>
    %c0_1 = arith.constant 0 : index
    %c0_2 = arith.constant 0 : index
    %1 = vector.load %arg2[%c0_1, %c0_2] : memref<32x64xbf16, #tpu.memory_space<vmem>>, vector<32x64xbf16>
    %cst = arith.constant dense<0.000000e+00> : vector<128x64xf32>
    %2 = tpu.matmul %0, %1, %cst {dimension_numbers = #tpu.dot_dimension_numbers<[1], [0], [0], [1], [0, 0, 1, 1], [], []>} : vector<128x32xbf16>, vector<32x64xbf16>, vector<128x64xf32> -> vector<128x64xf32>
    %3 = vector.extract_strided_slice %2 {offsets = [0, 0], sizes = [128, 16], strides = [1, 1]} : vector<128x64xf32> to vector<128x16xf32>
    %cst_3 = arith.constant dense<0.000000e+00> : vector<128xf32>
    %4 = vector.multi_reduction <add>, %3, %cst_3 [1] : vector<128x16xf32> to vector<128xf32>
    %5 = vector.shape_cast %4 : vector<128xf32> to vector<128x1xf32>
    %cst_4 = arith.constant 1.600000e+01 : f32
    %6 = vector.broadcast %cst_4 : f32 to vector<128x1xf32>
    %7 = arith.divf %5, %6 : vector<128x1xf32>
    %8 = vector.broadcast %7 : vector<128x1xf32> to vector<128x16xf32>
    %9 = arith.subf %3, %8 : vector<128x16xf32>
    %10 = arith.mulf %9, %9 : vector<128x16xf32>
    %cst_5 = arith.constant dense<0.000000e+00> : vector<128xf32>
    %11 = vector.multi_reduction <add>, %10, %cst_5 [1] : vector<128x16xf32> to vector<128xf32>
    %12 = vector.shape_cast %11 : vector<128xf32> to vector<128x1xf32>
    %cst_6 = arith.constant 1.600000e+01 : f32
    %13 = vector.broadcast %cst_6 : f32 to vector<128x1xf32>
    %14 = arith.divf %12, %13 : vector<128x1xf32>
    %cst_7 = arith.constant 9.99999974E-6 : f32
    %15 = vector.broadcast %cst_7 : f32 to vector<128x1xf32>
    %16 = arith.addf %14, %15 : vector<128x1xf32>
    %17 = math.rsqrt %16 : vector<128x1xf32>
    %18 = vector.broadcast %17 : vector<128x1xf32> to vector<128x16xf32>
    %19 = arith.mulf %9, %18 : vector<128x16xf32>
    %20 = vector.extract_strided_slice %2 {offsets = [0, 16], sizes = [128, 16], strides = [1, 1]} : vector<128x64xf32> to vector<128x16xf32>
    %cst_8 = arith.constant dense<0.000000e+00> : vector<128xf32>
    %21 = vector.multi_reduction <add>, %20, %cst_8 [1] : vector<128x16xf32> to vector<128xf32>
    %22 = vector.shape_cast %21 : vector<128xf32> to vector<128x1xf32>
    %cst_9 = arith.constant 1.600000e+01 : f32
    %23 = vector.broadcast %cst_9 : f32 to vector<128x1xf32>
    %24 = arith.divf %22, %23 : vector<128x1xf32>
    %25 = vector.broadcast %24 : vector<128x1xf32> to vector<128x16xf32>
    %26 = arith.subf %20, %25 : vector<128x16xf32>
    %27 = arith.mulf %26, %26 : vector<128x16xf32>
    %cst_10 = arith.constant dense<0.000000e+00> : vector<128xf32>
    %28 = vector.multi_reduction <add>, %27, %cst_10 [1] : vector<128x16xf32> to vector<128xf32>
    %29 = vector.shape_cast %28 : vector<128xf32> to vector<128x1xf32>
    %cst_11 = arith.constant 1.600000e+01 : f32
    %30 = vector.broadcast %cst_11 : f32 to vector<128x1xf32>
    %31 = arith.divf %29, %30 : vector<128x1xf32>
    %cst_12 = arith.constant 9.99999974E-6 : f32
    %32 = vector.broadcast %cst_12 : f32 to vector<128x1xf32>
    %33 = arith.addf %31, %32 : vector<128x1xf32>
    %34 = math.rsqrt %33 : vector<128x1xf32>
    %35 = vector.broadcast %34 : vector<128x1xf32> to vector<128x16xf32>
    %36 = arith.mulf %26, %35 : vector<128x16xf32>
    %37 = vector.extract_strided_slice %2 {offsets = [0, 32], sizes = [128, 16], strides = [1, 1]} : vector<128x64xf32> to vector<128x16xf32>
    %cst_13 = arith.constant dense<0.000000e+00> : vector<128xf32>
    %38 = vector.multi_reduction <add>, %37, %cst_13 [1] : vector<128x16xf32> to vector<128xf32>
    %39 = vector.shape_cast %38 : vector<128xf32> to vector<128x1xf32>
    %cst_14 = arith.constant 1.600000e+01 : f32
    %40 = vector.broadcast %cst_14 : f32 to vector<128x1xf32>
    %41 = arith.divf %39, %40 : vector<128x1xf32>
    %42 = vector.broadcast %41 : vector<128x1xf32> to vector<128x16xf32>
    %43 = arith.subf %37, %42 : vector<128x16xf32>
    %44 = arith.mulf %43, %43 : vector<128x16xf32>
    %cst_15 = arith.constant dense<0.000000e+00> : vector<128xf32>
    %45 = vector.multi_reduction <add>, %44, %cst_15 [1] : vector<128x16xf32> to vector<128xf32>
    %46 = vector.shape_cast %45 : vector<128xf32> to vector<128x1xf32>
    %cst_16 = arith.constant 1.600000e+01 : f32
    %47 = vector.broadcast %cst_16 : f32 to vector<128x1xf32>
    %48 = arith.divf %46, %47 : vector<128x1xf32>
    %cst_17 = arith.constant 9.99999974E-6 : f32
    %49 = vector.broadcast %cst_17 : f32 to vector<128x1xf32>
    %50 = arith.addf %48, %49 : vector<128x1xf32>
    %51 = math.rsqrt %50 : vector<128x1xf32>
    %52 = vector.broadcast %51 : vector<128x1xf32> to vector<128x16xf32>
    %53 = arith.mulf %43, %52 : vector<128x16xf32>
    %54 = vector.extract_strided_slice %2 {offsets = [0, 48], sizes = [128, 16], strides = [1, 1]} : vector<128x64xf32> to vector<128x16xf32>
    %cst_18 = arith.constant dense<0.000000e+00> : vector<128xf32>
    %55 = vector.multi_reduction <add>, %54, %cst_18 [1] : vector<128x16xf32> to vector<128xf32>
    %56 = vector.shape_cast %55 : vector<128xf32> to vector<128x1xf32>
    %cst_19 = arith.constant 1.600000e+01 : f32
    %57 = vector.broadcast %cst_19 : f32 to vector<128x1xf32>
    %58 = arith.divf %56, %57 : vector<128x1xf32>
    %59 = vector.broadcast %58 : vector<128x1xf32> to vector<128x16xf32>
    %60 = arith.subf %54, %59 : vector<128x16xf32>
    %61 = arith.mulf %60, %60 : vector<128x16xf32>
    %cst_20 = arith.constant dense<0.000000e+00> : vector<128xf32>
    %62 = vector.multi_reduction <add>, %61, %cst_20 [1] : vector<128x16xf32> to vector<128xf32>
    %63 = vector.shape_cast %62 : vector<128xf32> to vector<128x1xf32>
    %cst_21 = arith.constant 1.600000e+01 : f32
    %64 = vector.broadcast %cst_21 : f32 to vector<128x1xf32>
    %65 = arith.divf %63, %64 : vector<128x1xf32>
    %cst_22 = arith.constant 9.99999974E-6 : f32
    %66 = vector.broadcast %cst_22 : f32 to vector<128x1xf32>
    %67 = arith.addf %65, %66 : vector<128x1xf32>
    %68 = math.rsqrt %67 : vector<128x1xf32>
    %69 = vector.broadcast %68 : vector<128x1xf32> to vector<128x16xf32>
    %70 = arith.mulf %60, %69 : vector<128x16xf32>
    %71 = tpu.concatenate %19, %36, %53, %70 in 1 : vector<128x16xf32>, vector<128x16xf32>, vector<128x16xf32>, vector<128x16xf32> -> vector<128x64xf32>
    %c0_23 = arith.constant 0 : index
    %c0_24 = arith.constant 0 : index
    %72 = vector.load %arg3[%c0_23, %c0_24] : memref<1x64xf32, #tpu.memory_space<vmem>>, vector<1x64xf32>
    %73 = vector.broadcast %72 : vector<1x64xf32> to vector<128x64xf32>
    %74 = arith.mulf %71, %73 : vector<128x64xf32>
    %c0_25 = arith.constant 0 : index
    %c0_26 = arith.constant 0 : index
    %75 = vector.load %arg4[%c0_25, %c0_26] : memref<1x64xf32, #tpu.memory_space<vmem>>, vector<1x64xf32>
    %76 = vector.broadcast %75 : vector<1x64xf32> to vector<128x64xf32>
    %77 = arith.addf %74, %76 : vector<128x64xf32>
    %c0_27 = arith.constant 0 : index
    %c0_28 = arith.constant 0 : index
    %78 = vector.load %arg5[%c0_27, %c0_28] : memref<128x64xf32, #tpu.memory_space<vmem>>, vector<128x64xf32>
    tpu.vector_store %arg5[%c0_27, %c0_28], %77 {strides = array<i32>} : memref<128x64xf32, #tpu.memory_space<vmem>>, vector<128x64xf32>,
    return
  }
  func.func @transform_0(%arg0: i32) -> (i32, i32) {
    %c0_i32 = arith.constant 0 : i32
    %c0_i32_0 = arith.constant 0 : i32
    return %arg0, %c0_i32 : i32, i32
  }
  func.func @transform_1(%arg0: i32) -> (i32, i32) {
    %c0_i32 = arith.constant 0 : i32
    %c0_i32_0 = arith.constant 0 : i32
    %c0_i32_1 = arith.constant 0 : i32
    return %c0_i32, %c0_i32_0 : i32, i32
  }
  func.func @transform_2(%arg0: i32) -> (i32, i32) {
    %c0_i32 = arith.constant 0 : i32
    %c0_i32_0 = arith.constant 0 : i32
    %c0_i32_1 = arith.constant 0 : i32
    return %c0_i32, %c0_i32_0 : i32, i32
  }
  func.func @transform_3(%arg0: i32) -> (i32, i32) {
    %c0_i32 = arith.constant 0 : i32
    %c0_i32_0 = arith.constant 0 : i32
    %c0_i32_1 = arith.constant 0 : i32
    return %c0_i32, %c0_i32_0 : i32, i32
  }
  func.func @transform_4(%arg0: i32) -> (i32, i32) {
    %c0_i32 = arith.constant 0 : i32
    %c0_i32_0 = arith.constant 0 : i32
    return %arg0, %c0_i32 : i32, i32
  }
}

</mosaic_0001>

<llo_original>
// kernel: tpu_custom_call.1
$region0: #{tpu_custom_call.1}
  #allocation0 [shape = 'u32[]', space=smem, size = 0x4, offset = 0x4, fixed_abs, tag = 'smem constant byte address 0x4 - core index']
  #allocation1 [shape = 'u32[144,128]{1,0:T(1,128)}', space=vmem, size = 0x12000, scoped, tag = 'internal scratch']
  %s0 = inlined_call_operand.vmem [shape: bf16[128,32], index: 0, kind: input, shape index: {}]
  %s1 = inlined_call_operand.vmem [shape: bf16[32,64], index: 1, kind: input, shape index: {}]
  %s2 = inlined_call_operand.vmem [shape: f32[1,64], index: 2, kind: input, shape index: {}]
  %s3 = inlined_call_operand.vmem [shape: f32[1,64], index: 3, kind: input, shape index: {}]
  %s4 = inlined_call_operand.vmem [shape: f32[128,64], index: 4, kind: output, shape index: {}]
  %s5 = sld [smem:[#allocation0]]
  $region26: #{tpu_custom_call.1} parent=0
    _
  %s7 = ssub.s32 1, %s5
  %s8 = scalar_select 0, %s7, %s5
  // Predicated region
  $region2: #{tpu_custom_call.1} parent=0 // pred_check
    _
  $region3: #{tpu_custom_call.1} parent=0 // pred_check_branch
    %10 = sbr.rel (0) target = $region5
  $region4: #{tpu_custom_call.1} parent=0 // pred_region
    _
  $region5: #{tpu_custom_call.1} parent=0 // pred_fallthru
    _
  // Predicated region
  $region6: #{tpu_custom_call.1} parent=0 // pred_check
    _
  $region7: #{tpu_custom_call.1} parent=0 // pred_check_branch
    %12 = sbr.rel (0) target = $region9
  $region8: #{tpu_custom_call.1} parent=0 // pred_region
    _
  $region9: #{tpu_custom_call.1} parent=0 // pred_fallthru
    _
  // Predicated region
  $region10: #{tpu_custom_call.1} parent=0 // pred_check
    _
  $region11: #{tpu_custom_call.1} parent=0 // pred_check_branch
    %14 = sbr.rel (0) target = $region13
  $region12: #{tpu_custom_call.1} parent=0 // pred_region
    _
  $region13: #{tpu_custom_call.1} parent=0 // pred_fallthru
    _
  // Predicated region
  $region14: #{tpu_custom_call.1} parent=0 // pred_check
    _
  $region15: #{tpu_custom_call.1} parent=0 // pred_check_branch
    %16 = sbr.rel (0) target = $region17
  $region16: #{tpu_custom_call.1} parent=0 // pred_region
    _
  $region17: #{tpu_custom_call.1} parent=0 // pred_fallthru
    _
  %v18 = vld [vmem:[%s0] sm:$0xf]
  %v19 = vld [vmem:[%s0 + $0x4] sm:$0xf]
  %v20 = vld [vmem:[%s0 + $0x8] sm:$0xf]
  %v21 = vld [vmem:[%s0 + $0xc] sm:$0xf]
  %v22 = vld [vmem:[%s0 + $0x10] sm:$0xf]
  %v23 = vld [vmem:[%s0 + $0x14] sm:$0xf]
  %v24 = vld [vmem:[%s0 + $0x18] sm:$0xf]
  %v25 = vld [vmem:[%s0 + $0x1c] sm:$0xf]
  %v26 = vld [vmem:[%s0 + $0x20] sm:$0xf]
  %v27 = vld [vmem:[%s0 + $0x24] sm:$0xf]
  %v28 = vld [vmem:[%s0 + $0x28] sm:$0xf]
  %v29 = vld [vmem:[%s0 + $0x2c] sm:$0xf]
  %v30 = vld [vmem:[%s0 + $0x30] sm:$0xf]
  %v31 = vld [vmem:[%s0 + $0x34] sm:$0xf]
  %v32 = vld [vmem:[%s0 + $0x38] sm:$0xf]
  %v33 = vld [vmem:[%s0 + $0x3c] sm:$0xf]
  %v34 = vld [vmem:[%s1] sm:$0xf]
  %v35 = vld [vmem:[%s1 + $0x4] sm:$0xf]
  %v36 = vld [vmem:[%s1 + $0x8] sm:$0xf]
  %v37 = vld [vmem:[%s1 + $0xc] sm:$0xf]
  %v54 = vunpack.c.l.b16 %v18
  %v55 = vunpack.c.l.b16 %v19
  %v56 = vunpack.c.l.b16 %v20
  %v57 = vunpack.c.l.b16 %v21
  %v58 = vunpack.c.l.b16 %v22
  %v59 = vunpack.c.l.b16 %v23
  %v60 = vunpack.c.l.b16 %v24
  %v61 = vunpack.c.l.b16 %v25
  %v62 = vunpack.c.l.b16 %v26
  %v63 = vunpack.c.l.b16 %v27
  %v64 = vunpack.c.l.b16 %v28
  %v65 = vunpack.c.l.b16 %v29
  %v66 = vunpack.c.l.b16 %v30
  %v67 = vunpack.c.l.b16 %v31
  %v68 = vunpack.c.l.b16 %v32
  %v69 = vunpack.c.l.b16 %v33
  %v70 = vpack.c.b16 %v55, %v54
  %v71 = vpack.c.b16 %v57, %v56
  %v72 = vpack.c.b16 %v59, %v58
  %v73 = vpack.c.b16 %v61, %v60
  %v74 = vpack.c.b16 %v63, %v62
  %v75 = vpack.c.b16 %v65, %v64
  %v76 = vpack.c.b16 %v67, %v66
  %v77 = vpack.c.b16 %v69, %v68
  %v82 = vunpack.c.l.b16 %v34
  %v83 = vunpack.c.l.b16 %v35
  %v84 = vunpack.c.l.b16 %v36
  %v85 = vunpack.c.l.b16 %v37
  %v86 = vpack.c.b16 %v83, %v82
  %v87 = vpack.c.b16 %v85, %v84
  %vm90 = vcmask 261120
  %v92 = vsel %vm90, %v70, 0
  %v95 = vsel %vm90, %v71, 0
  %v98 = vsel %vm90, %v72, 0
  %v101 = vsel %vm90, %v73, 0
  %v104 = vsel %vm90, %v74, 0
  %v107 = vsel %vm90, %v75, 0
  %v110 = vsel %vm90, %v76, 0
  %v113 = vsel %vm90, %v77, 0
  %115 = vmatprep.subr.bf16.mxu0 0
  %116 = vmatpush1.bf16.msra.mxu0 %v86
  %117 = vmatprep.subr.bf16.mxu0 0
  %118 = vmatpush1.bf16.msra.mxu0 %v87
  %119 = vmatprep.subr.bf16.mxu0 0
  %120 = vmatpush1.bf16.msra.mxu0 0
  %121 = vmatprep.subr.bf16.mxu0 0
  %122 = vmatpush1.bf16.msra.mxu0 0
  %123 = vmatprep.subr.bf16.mxu0 0
  %124 = vmatpush1.bf16.msra.mxu0 0
  %125 = vmatprep.subr.bf16.mxu0 0
  %126 = vmatpush1.bf16.msra.mxu0 0
  %127 = vmatprep.subr.bf16.mxu0 0
  %128 = vmatpush1.bf16.msra.mxu0 0
  %129 = vmatprep.subr.bf16.mxu0 0
  %130 = vmatpush1.bf16.msra.mxu0 0
  %131 = vmatprep.subr.bf16.mxu0 0
  %132 = vmatpush1.bf16.msra.mxu0 0
  %133 = vmatprep.subr.bf16.mxu0 0
  %134 = vmatpush1.bf16.msra.mxu0 0
  %135 = vmatprep.subr.bf16.mxu0 0
  %136 = vmatpush1.bf16.msra.mxu0 0
  %137 = vmatprep.subr.bf16.mxu0 0
  %138 = vmatpush1.bf16.msra.mxu0 0
  %139 = vmatprep.subr.bf16.mxu0 0
  %140 = vmatpush1.bf16.msra.mxu0 0
  %141 = vmatprep.subr.bf16.mxu0 0
  %142 = vmatpush1.bf16.msra.mxu0 0
  %143 = vmatprep.subr.bf16.mxu0 0
  %144 = vmatpush1.bf16.msra.mxu0 0
  %145 = vmatprep.subr.bf16.mxu0 0
  %146 = vmatpush1.bf16.msra.mxu0 0
  %147 = vmatprep.mubr.bf16.mxu0 0
  %148 = vmatmul.mubr.bf16.gmra.mrb[0].mxu0 %v92
  %v149 = vpop.f32.mrb[0].mxu0
  %v150 = vadd.f32 0.0, %v149
  %v151 = vpop.f32.mrb[0].mxu0
  %v152 = vpop.f32.mrb[0].mxu0
  %v153 = vadd.f32 0.0, %v152
  %v154 = vpop.f32.mrb[0].mxu0
  %155 = vmatprep.mubr.bf16.mxu0 0
  %156 = vmatmul.mubr.bf16.gmra.mrb[0].mxu0 %v95
  %v157 = vpop.f32.mrb[0].mxu0
  %v158 = vadd.f32 0.0, %v157
  %v159 = vpop.f32.mrb[0].mxu0
  %v160 = vpop.f32.mrb[0].mxu0
  %v161 = vadd.f32 0.0, %v160
  %v162 = vpop.f32.mrb[0].mxu0
  %163 = vmatprep.mubr.bf16.mxu0 0
  %164 = vmatmul.mubr.bf16.gmra.mrb[0].mxu0 %v98
  %v165 = vpop.f32.mrb[0].mxu0
  %v166 = vadd.f32 0.0, %v165
  %v167 = vpop.f32.mrb[0].mxu0
  %v168 = vpop.f32.mrb[0].mxu0
  %v169 = vadd.f32 0.0, %v168
  %v170 = vpop.f32.mrb[0].mxu0
  %171 = vmatprep.mubr.bf16.mxu0 0
  %172 = vmatmul.mubr.bf16.gmra.mrb[0].mxu0 %v101
  %v173 = vpop.f32.mrb[0].mxu0
  %v174 = vadd.f32 0.0, %v173
  %v175 = vpop.f32.mrb[0].mxu0
  %v176 = vpop.f32.mrb[0].mxu0
  %v177 = vadd.f32 0.0, %v176
  %v178 = vpop.f32.mrb[0].mxu0
  %179 = vmatprep.mubr.bf16.mxu0 0
  %180 = vmatmul.mubr.bf16.gmra.mrb[0].mxu0 %v104
  %v181 = vpop.f32.mrb[0].mxu0
  %v182 = vadd.f32 0.0, %v181
  %v183 = vpop.f32.mrb[0].mxu0
  %v184 = vpop.f32.mrb[0].mxu0
  %v185 = vadd.f32 0.0, %v184
  %v186 = vpop.f32.mrb[0].mxu0
  %187 = vmatprep.mubr.bf16.mxu0 0
  %188 = vmatmul.mubr.bf16.gmra.mrb[0].mxu0 %v107
  %v189 = vpop.f32.mrb[0].mxu0
  %v190 = vadd.f32 0.0, %v189
  %v191 = vpop.f32.mrb[0].mxu0
  %v192 = vpop.f32.mrb[0].mxu0
  %v193 = vadd.f32 0.0, %v192
  %v194 = vpop.f32.mrb[0].mxu0
  %195 = vmatprep.mubr.bf16.mxu0 0
  %196 = vmatmul.mubr.bf16.gmra.mrb[0].mxu0 %v110
  %v197 = vpop.f32.mrb[0].mxu0
  %v198 = vadd.f32 0.0, %v197
  %v199 = vpop.f32.mrb[0].mxu0
  %v200 = vpop.f32.mrb[0].mxu0
  %v201 = vadd.f32 0.0, %v200
  %v202 = vpop.f32.mrb[0].mxu0
  %203 = vmatprep.mubr.bf16.mxu0 0
  %204 = vmatmul.mubr.bf16.gmra.mrb[0].mxu0 %v113
  %v205 = vpop.f32.mrb[0].mxu0
  %v206 = vadd.f32 0.0, %v205
  %v207 = vpop.f32.mrb[0].mxu0
  %v208 = vpop.f32.mrb[0].mxu0
  %v209 = vadd.f32 0.0, %v208
  %v210 = vpop.f32.mrb[0].mxu0
  %211 = vdwg.mxu0
  %vm212 = vcmask 130048
  %v213 = vsel %vm212, %v150, 0.0
  %214 = vadd.xlane.f32.xlu0 %v213
  %v215 = vpop.xlane.xlu0 %214
  %v216 = vsel %vm212, %v153, 0.0
  %217 = vadd.xlane.f32.xlu0 %v216
  %v218 = vpop.xlane.xlu0 %217
  %v219 = vsel %vm212, %v158, 0.0
  %220 = vadd.xlane.f32.xlu0 %v219
  %v221 = vpop.xlane.xlu0 %220
  %v222 = vsel %vm212, %v161, 0.0
  %223 = vadd.xlane.f32.xlu0 %v222
  %v224 = vpop.xlane.xlu0 %223
  %v225 = vsel %vm212, %v166, 0.0
  %226 = vadd.xlane.f32.xlu0 %v225
  %v227 = vpop.xlane.xlu0 %226
  %v228 = vsel %vm212, %v169, 0.0
  %229 = vadd.xlane.f32.xlu0 %v228
  %v230 = vpop.xlane.xlu0 %229
  %v231 = vsel %vm212, %v174, 0.0
  %232 = vadd.xlane.f32.xlu0 %v231
  %v233 = vpop.xlane.xlu0 %232
  %v234 = vsel %vm212, %v177, 0.0
  %235 = vadd.xlane.f32.xlu0 %v234
  %v236 = vpop.xlane.xlu0 %235
  %v237 = vsel %vm212, %v182, 0.0
  %238 = vadd.xlane.f32.xlu0 %v237
  %v239 = vpop.xlane.xlu0 %238
  %v240 = vsel %vm212, %v185, 0.0
  %241 = vadd.xlane.f32.xlu0 %v240
  %v242 = vpop.xlane.xlu0 %241
  %v243 = vsel %vm212, %v190, 0.0
  %244 = vadd.xlane.f32.xlu0 %v243
  %v245 = vpop.xlane.xlu0 %244
  %v246 = vsel %vm212, %v193, 0.0
  %247 = vadd.xlane.f32.xlu0 %v246
  %v248 = vpop.xlane.xlu0 %247
  %v249 = vsel %vm212, %v198, 0.0
  %250 = vadd.xlane.f32.xlu0 %v249
  %v251 = vpop.xlane.xlu0 %250
  %v252 = vsel %vm212, %v201, 0.0
  %253 = vadd.xlane.f32.xlu0 %v252
  %v254 = vpop.xlane.xlu0 %253
  %v255 = vsel %vm212, %v206, 0.0
  %256 = vadd.xlane.f32.xlu0 %v255
  %v257 = vpop.xlane.xlu0 %256
  %v258 = vsel %vm212, %v209, 0.0
  %259 = vadd.xlane.f32.xlu0 %v258
  %v260 = vpop.xlane.xlu0 %259
  %v261 = vrcp.pop 16.0
  %v262 = vmul.f32 %v215, %v261
  %v263 = vmul.f32 %v218, %v261
  %v264 = vmul.f32 %v221, %v261
  %v265 = vmul.f32 %v224, %v261
  %v266 = vmul.f32 %v227, %v261
  %v267 = vmul.f32 %v230, %v261
  %v268 = vmul.f32 %v233, %v261
  %v269 = vmul.f32 %v236, %v261
  %v270 = vmul.f32 %v239, %v261
  %v271 = vmul.f32 %v242, %v261
  %v272 = vmul.f32 %v245, %v261
  %v273 = vmul.f32 %v248, %v261
  %v274 = vmul.f32 %v251, %v261
  %v275 = vmul.f32 %v254, %v261
  %v276 = vmul.f32 %v257, %v261
  %v277 = vmul.f32 %v260, %v261
  %v278 = vsub.f32 %v150, %v262
  %v279 = vsub.f32 %v153, %v263
  %v280 = vsub.f32 %v158, %v264
  %v281 = vsub.f32 %v161, %v265
  %v282 = vsub.f32 %v166, %v266
  %v283 = vsub.f32 %v169, %v267
  %v284 = vsub.f32 %v174, %v268
  %v285 = vsub.f32 %v177, %v269
  %v286 = vsub.f32 %v182, %v270
  %v287 = vsub.f32 %v185, %v271
  %v288 = vsub.f32 %v190, %v272
  %v289 = vsub.f32 %v193, %v273
  %v290 = vsub.f32 %v198, %v274
  %v291 = vsub.f32 %v201, %v275
  %v292 = vsub.f32 %v206, %v276
  %v293 = vsub.f32 %v209, %v277
  %v294 = vmul.f32 %v278, %v278
  %v295 = vmul.f32 %v279, %v279
  %v296 = vmul.f32 %v280, %v280
  %v297 = vmul.f32 %v281, %v281
  %v298 = vmul.f32 %v282, %v282
  %v299 = vmul.f32 %v283, %v283
  %v300 = vmul.f32 %v284, %v284
  %v301 = vmul.f32 %v285, %v285
  %v302 = vmul.f32 %v286, %v286
  %v303 = vmul.f32 %v287, %v287
  %v304 = vmul.f32 %v288, %v288
  %v305 = vmul.f32 %v289, %v289
  %v306 = vmul.f32 %v290, %v290
  %v307 = vmul.f32 %v291, %v291
  %v308 = vmul.f32 %v292, %v292
  %v309 = vmul.f32 %v293, %v293
  %v310 = vsel %vm212, %v294, 0.0
  %311 = vadd.xlane.f32.xlu0 %v310
  %v312 = vpop.xlane.xlu0 %311
  %v313 = vsel %vm212, %v295, 0.0
  %314 = vadd.xlane.f32.xlu0 %v313
  %v315 = vpop.xlane.xlu0 %314
  %v316 = vsel %vm212, %v296, 0.0
  %317 = vadd.xlane.f32.xlu0 %v316
  %v318 = vpop.xlane.xlu0 %317
  %v319 = vsel %vm212, %v297, 0.0
  %320 = vadd.xlane.f32.xlu0 %v319
  %v321 = vpop.xlane.xlu0 %320
  %v322 = vsel %vm212, %v298, 0.0
  %323 = vadd.xlane.f32.xlu0 %v322
  %v324 = vpop.xlane.xlu0 %323
  %v325 = vsel %vm212, %v299, 0.0
  %326 = vadd.xlane.f32.xlu0 %v325
  %v327 = vpop.xlane.xlu0 %326
  %v328 = vsel %vm212, %v300, 0.0
  %329 = vadd.xlane.f32.xlu0 %v328
  %v330 = vpop.xlane.xlu0 %329
  %v331 = vsel %vm212, %v301, 0.0
  %332 = vadd.xlane.f32.xlu0 %v331
  %v333 = vpop.xlane.xlu0 %332
  %v334 = vsel %vm212, %v302, 0.0
  %335 = vadd.xlane.f32.xlu0 %v334
  %v336 = vpop.xlane.xlu0 %335
  %v337 = vsel %vm212, %v303, 0.0
  %338 = vadd.xlane.f32.xlu0 %v337
  %v339 = vpop.xlane.xlu0 %338
  %v340 = vsel %vm212, %v304, 0.0
  %341 = vadd.xlane.f32.xlu0 %v340
  %v342 = vpop.xlane.xlu0 %341
  %v343 = vsel %vm212, %v305, 0.0
  %344 = vadd.xlane.f32.xlu0 %v343
  %v345 = vpop.xlane.xlu0 %344
  %v346 = vsel %vm212, %v306, 0.0
  %347 = vadd.xlane.f32.xlu0 %v346
  %v348 = vpop.xlane.xlu0 %347
  %v349 = vsel %vm212, %v307, 0.0
  %350 = vadd.xlane.f32.xlu0 %v349
  %v351 = vpop.xlane.xlu0 %350
  %v352 = vsel %vm212, %v308, 0.0
  %353 = vadd.xlane.f32.xlu0 %v352
  %v354 = vpop.xlane.xlu0 %353
  %v355 = vsel %vm212, %v309, 0.0
  %356 = vadd.xlane.f32.xlu0 %v355
  %v357 = vpop.xlane.xlu0 %356
  %v358 = vmul.f32 %v312, %v261
  %v359 = vmul.f32 %v315, %v261
  %v360 = vmul.f32 %v318, %v261
  %v361 = vmul.f32 %v321, %v261
  %v362 = vmul.f32 %v324, %v261
  %v363 = vmul.f32 %v327, %v261
  %v364 = vmul.f32 %v330, %v261
  %v365 = vmul.f32 %v333, %v261
  %v366 = vmul.f32 %v336, %v261
  %v367 = vmul.f32 %v339, %v261
  %v368 = vmul.f32 %v342, %v261
  %v369 = vmul.f32 %v345, %v261
  %v370 = vmul.f32 %v348, %v261
  %v371 = vmul.f32 %v351, %v261
  %v372 = vmul.f32 %v354, %v261
  %v373 = vmul.f32 %v357, %v261
  %v374 = vadd.f32 %v358, 1e-05
  %v375 = vadd.f32 %v359, 1e-05
  %v376 = vadd.f32 %v360, 1e-05
  %v377 = vadd.f32 %v361, 1e-05
  %v378 = vadd.f32 %v362, 1e-05
  %v379 = vadd.f32 %v363, 1e-05
  %v380 = vadd.f32 %v364, 1e-05
  %v381 = vadd.f32 %v365, 1e-05
  %v382 = vadd.f32 %v366, 1e-05
  %v383 = vadd.f32 %v367, 1e-05
  %v384 = vadd.f32 %v368, 1e-05
  %v385 = vadd.f32 %v369, 1e-05
  %v386 = vadd.f32 %v370, 1e-05
  %v387 = vadd.f32 %v371, 1e-05
  %v388 = vadd.f32 %v372, 1e-05
  %v389 = vadd.f32 %v373, 1e-05
  %v390 = vrsqrt.pop %v374
  %v391 = vrsqrt.pop %v375
  %v392 = vrsqrt.pop %v376
  %v393 = vrsqrt.pop %v377
  %v394 = vrsqrt.pop %v378
  %v395 = vrsqrt.pop %v379
  %v396 = vrsqrt.pop %v380
  %v397 = vrsqrt.pop %v381
  %v398 = vrsqrt.pop %v382
  %v399 = vrsqrt.pop %v383
  %v400 = vrsqrt.pop %v384
  %v401 = vrsqrt.pop %v385
  %v402 = vrsqrt.pop %v386
  %v403 = vrsqrt.pop %v387
  %v404 = vrsqrt.pop %v388
  %v405 = vrsqrt.pop %v389
  %v406 = vmul.f32 %v278, %v390
  %v407 = vmul.f32 %v279, %v391
  %v408 = vmul.f32 %v280, %v392
  %v409 = vmul.f32 %v281, %v393
  %v410 = vmul.f32 %v282, %v394
  %v411 = vmul.f32 %v283, %v395
  %v412 = vmul.f32 %v284, %v396
  %v413 = vmul.f32 %v285, %v397
  %v414 = vmul.f32 %v286, %v398
  %v415 = vmul.f32 %v287, %v399
  %v416 = vmul.f32 %v288, %v400
  %v417 = vmul.f32 %v289, %v401
  %v418 = vmul.f32 %v290, %v402
  %v419 = vmul.f32 %v291, %v403
  %v420 = vmul.f32 %v292, %v404
  %v421 = vmul.f32 %v293, %v405
  %438 = vrot.lane.b32.xlu0 %v150, 112
  %v439 = vpop.permute.xlu0 %438
  %440 = vrot.lane.b32.xlu0 %v153, 112
  %v441 = vpop.permute.xlu0 %440
  %442 = vrot.lane.b32.xlu0 %v158, 112
  %v443 = vpop.permute.xlu0 %442
  %444 = vrot.lane.b32.xlu0 %v161, 112
  %v445 = vpop.permute.xlu0 %444
  %446 = vrot.lane.b32.xlu0 %v166, 112
  %v447 = vpop.permute.xlu0 %446
  %448 = vrot.lane.b32.xlu0 %v169, 112
  %v449 = vpop.permute.xlu0 %448
  %450 = vrot.lane.b32.xlu0 %v174, 112
  %v451 = vpop.permute.xlu0 %450
  %452 = vrot.lane.b32.xlu0 %v177, 112
  %v453 = vpop.permute.xlu0 %452
  %454 = vrot.lane.b32.xlu0 %v182, 112
  %v455 = vpop.permute.xlu0 %454
  %456 = vrot.lane.b32.xlu0 %v185, 112
  %v457 = vpop.permute.xlu0 %456
  %458 = vrot.lane.b32.xlu0 %v190, 112
  %v459 = vpop.permute.xlu0 %458
  %460 = vrot.lane.b32.xlu0 %v193, 112
  %v461 = vpop.permute.xlu0 %460
  %462 = vrot.lane.b32.xlu0 %v198, 112
  %v463 = vpop.permute.xlu0 %462
  %464 = vrot.lane.b32.xlu0 %v201, 112
  %v465 = vpop.permute.xlu0 %464
  %466 = vrot.lane.b32.xlu0 %v206, 112
  %v467 = vpop.permute.xlu0 %466
  %468 = vrot.lane.b32.xlu0 %v209, 112
  %v469 = vpop.permute.xlu0 %468
  %v486 = vsel %vm212, %v439, 0.0
  %487 = vadd.xlane.f32.xlu0 %v486
  %v488 = vpop.xlane.xlu0 %487
  %v489 = vsel %vm212, %v441, 0.0
  %490 = vadd.xlane.f32.xlu0 %v489
  %v491 = vpop.xlane.xlu0 %490
  %v492 = vsel %vm212, %v443, 0.0
  %493 = vadd.xlane.f32.xlu0 %v492
  %v494 = vpop.xlane.xlu0 %493
  %v495 = vsel %vm212, %v445, 0.0
  %496 = vadd.xlane.f32.xlu0 %v495
  %v497 = vpop.xlane.xlu0 %496
  %v498 = vsel %vm212, %v447, 0.0
  %499 = vadd.xlane.f32.xlu0 %v498
  %v500 = vpop.xlane.xlu0 %499
  %v501 = vsel %vm212, %v449, 0.0
  %502 = vadd.xlane.f32.xlu0 %v501
  %v503 = vpop.xlane.xlu0 %502
  %v504 = vsel %vm212, %v451, 0.0
  %505 = vadd.xlane.f32.xlu0 %v504
  %v506 = vpop.xlane.xlu0 %505
  %v507 = vsel %vm212, %v453, 0.0
  %508 = vadd.xlane.f32.xlu0 %v507
  %v509 = vpop.xlane.xlu0 %508
  %v510 = vsel %vm212, %v455, 0.0
  %511 = vadd.xlane.f32.xlu0 %v510
  %v512 = vpop.xlane.xlu0 %511
  %v513 = vsel %vm212, %v457, 0.0
  %514 = vadd.xlane.f32.xlu0 %v513
  %v515 = vpop.xlane.xlu0 %514
  %v516 = vsel %vm212, %v459, 0.0
  %517 = vadd.xlane.f32.xlu0 %v516
  %v518 = vpop.xlane.xlu0 %517
  %v519 = vsel %vm212, %v461, 0.0
  %520 = vadd.xlane.f32.xlu0 %v519
  %v521 = vpop.xlane.xlu0 %520
  %v522 = vsel %vm212, %v463, 0.0
  %523 = vadd.xlane.f32.xlu0 %v522
  %v524 = vpop.xlane.xlu0 %523
  %v525 = vsel %vm212, %v465, 0.0
  %526 = vadd.xlane.f32.xlu0 %v525
  %v527 = vpop.xlane.xlu0 %526
  %v528 = vsel %vm212, %v467, 0.0
  %529 = vadd.xlane.f32.xlu0 %v528
  %v530 = vpop.xlane.xlu0 %529
  %v531 = vsel %vm212, %v469, 0.0
  %532 = vadd.xlane.f32.xlu0 %v531
  %v533 = vpop.xlane.xlu0 %532
  %v534 = vmul.f32 %v488, %v261
  %v535 = vmul.f32 %v491, %v261
  %v536 = vmul.f32 %v494, %v261
  %v537 = vmul.f32 %v497, %v261
  %v538 = vmul.f32 %v500, %v261
  %v539 = vmul.f32 %v503, %v261
  %v540 = vmul.f32 %v506, %v261
  %v541 = vmul.f32 %v509, %v261
  %v542 = vmul.f32 %v512, %v261
  %v543 = vmul.f32 %v515, %v261
  %v544 = vmul.f32 %v518, %v261
  %v545 = vmul.f32 %v521, %v261
  %v546 = vmul.f32 %v524, %v261
  %v547 = vmul.f32 %v527, %v261
  %v548 = vmul.f32 %v530, %v261
  %v549 = vmul.f32 %v533, %v261
  %v550 = vsub.f32 %v150, %v534
  %v551 = vsub.f32 %v153, %v535
  %v552 = vsub.f32 %v158, %v536
  %v553 = vsub.f32 %v161, %v537
  %v554 = vsub.f32 %v166, %v538
  %v555 = vsub.f32 %v169, %v539
  %v556 = vsub.f32 %v174, %v540
  %v557 = vsub.f32 %v177, %v541
  %v558 = vsub.f32 %v182, %v542
  %v559 = vsub.f32 %v185, %v543
  %v560 = vsub.f32 %v190, %v544
  %v561 = vsub.f32 %v193, %v545
  %v562 = vsub.f32 %v198, %v546
  %v563 = vsub.f32 %v201, %v547
  %v564 = vsub.f32 %v206, %v548
  %v565 = vsub.f32 %v209, %v549
  %v566 = vmul.f32 %v550, %v550
  %v567 = vmul.f32 %v551, %v551
  %v568 = vmul.f32 %v552, %v552
  %v569 = vmul.f32 %v553, %v553
  %v570 = vmul.f32 %v554, %v554
  %v571 = vmul.f32 %v555, %v555
  %v572 = vmul.f32 %v556, %v556
  %v573 = vmul.f32 %v557, %v557
  %v574 = vmul.f32 %v558, %v558
  %v575 = vmul.f32 %v559, %v559
  %v576 = vmul.f32 %v560, %v560
  %v577 = vmul.f32 %v561, %v561
  %v578 = vmul.f32 %v562, %v562
  %v579 = vmul.f32 %v563, %v563
  %v580 = vmul.f32 %v564, %v564
  %v581 = vmul.f32 %v565, %v565
  %598 = vrot.lane.b32.xlu0 %v566, 112
  %v599 = vpop.permute.xlu0 %598
  %600 = vrot.lane.b32.xlu0 %v567, 112
  %v601 = vpop.permute.xlu0 %600
  %602 = vrot.lane.b32.xlu0 %v568, 112
  %v603 = vpop.permute.xlu0 %602
  %604 = vrot.lane.b32.xlu0 %v569, 112
  %v605 = vpop.permute.xlu0 %604
  %606 = vrot.lane.b32.xlu0 %v570, 112
  %v607 = vpop.permute.xlu0 %606
  %608 = vrot.lane.b32.xlu0 %v571, 112
  %v609 = vpop.permute.xlu0 %608
  %610 = vrot.lane.b32.xlu0 %v572, 112
  %v611 = vpop.permute.xlu0 %610
  %612 = vrot.lane.b32.xlu0 %v573, 112
  %v613 = vpop.permute.xlu0 %612
  %614 = vrot.lane.b32.xlu0 %v574, 112
  %v615 = vpop.permute.xlu0 %614
  %616 = vrot.lane.b32.xlu0 %v575, 112
  %v617 = vpop.permute.xlu0 %616
  %618 = vrot.lane.b32.xlu0 %v576, 112
  %v619 = vpop.permute.xlu0 %618
  %620 = vrot.lane.b32.xlu0 %v577, 112
  %v621 = vpop.permute.xlu0 %620
  %622 = vrot.lane.b32.xlu0 %v578, 112
  %v623 = vpop.permute.xlu0 %622
  %624 = vrot.lane.b32.xlu0 %v579, 112
  %v625 = vpop.permute.xlu0 %624
  %626 = vrot.lane.b32.xlu0 %v580, 112
  %v627 = vpop.permute.xlu0 %626
  %628 = vrot.lane.b32.xlu0 %v581, 112
  %v629 = vpop.permute.xlu0 %628
  %v646 = vsel %vm212, %v599, 0.0
  %647 = vadd.xlane.f32.xlu0 %v646
  %v648 = vpop.xlane.xlu0 %647
  %v649 = vsel %vm212, %v601, 0.0
  %650 = vadd.xlane.f32.xlu0 %v649
  %v651 = vpop.xlane.xlu0 %650
  %v652 = vsel %vm212, %v603, 0.0
  %653 = vadd.xlane.f32.xlu0 %v652
  %v654 = vpop.xlane.xlu0 %653
  %v655 = vsel %vm212, %v605, 0.0
  %656 = vadd.xlane.f32.xlu0 %v655
  %v657 = vpop.xlane.xlu0 %656
  %v658 = vsel %vm212, %v607, 0.0
  %659 = vadd.xlane.f32.xlu0 %v658
  %v660 = vpop.xlane.xlu0 %659
  %v661 = vsel %vm212, %v609, 0.0
  %662 = vadd.xlane.f32.xlu0 %v661
  %v663 = vpop.xlane.xlu0 %662
  %v664 = vsel %vm212, %v611, 0.0
  %665 = vadd.xlane.f32.xlu0 %v664
  %v666 = vpop.xlane.xlu0 %665
  %v667 = vsel %vm212, %v613, 0.0
  %668 = vadd.xlane.f32.xlu0 %v667
  %v669 = vpop.xlane.xlu0 %668
  %v670 = vsel %vm212, %v615, 0.0
  %671 = vadd.xlane.f32.xlu0 %v670
  %v672 = vpop.xlane.xlu0 %671
  %v673 = vsel %vm212, %v617, 0.0
  %674 = vadd.xlane.f32.xlu0 %v673
  %v675 = vpop.xlane.xlu0 %674
  %v676 = vsel %vm212, %v619, 0.0
  %677 = vadd.xlane.f32.xlu0 %v676
  %v678 = vpop.xlane.xlu0 %677
  %v679 = vsel %vm212, %v621, 0.0
  %680 = vadd.xlane.f32.xlu0 %v679
  %v681 = vpop.xlane.xlu0 %680
  %v682 = vsel %vm212, %v623, 0.0
  %683 = vadd.xlane.f32.xlu0 %v682
  %v684 = vpop.xlane.xlu0 %683
  %v685 = vsel %vm212, %v625, 0.0
  %686 = vadd.xlane.f32.xlu0 %v685
  %v687 = vpop.xlane.xlu0 %686
  %v688 = vsel %vm212, %v627, 0.0
  %689 = vadd.xlane.f32.xlu0 %v688
  %v690 = vpop.xlane.xlu0 %689
  %v691 = vsel %vm212, %v629, 0.0
  %692 = vadd.xlane.f32.xlu0 %v691
  %v693 = vpop.xlane.xlu0 %692
  %v694 = vmul.f32 %v648, %v261
  %v695 = vmul.f32 %v651, %v261
  %v696 = vmul.f32 %v654, %v261
  %v697 = vmul.f32 %v657, %v261
  %v698 = vmul.f32 %v660, %v261
  %v699 = vmul.f32 %v663, %v261
  %v700 = vmul.f32 %v666, %v261
  %v701 = vmul.f32 %v669, %v261
  %v702 = vmul.f32 %v672, %v261
  %v703 = vmul.f32 %v675, %v261
  %v704 = vmul.f32 %v678, %v261
  %v705 = vmul.f32 %v681, %v261
  %v706 = vmul.f32 %v684, %v261
  %v707 = vmul.f32 %v687, %v261
  %v708 = vmul.f32 %v690, %v261
  %v709 = vmul.f32 %v693, %v261
  %v710 = vadd.f32 %v694, 1e-05
  %v711 = vadd.f32 %v695, 1e-05
  %v712 = vadd.f32 %v696, 1e-05
  %v713 = vadd.f32 %v697, 1e-05
  %v714 = vadd.f32 %v698, 1e-05
  %v715 = vadd.f32 %v699, 1e-05
  %v716 = vadd.f32 %v700, 1e-05
  %v717 = vadd.f32 %v701, 1e-05
  %v718 = vadd.f32 %v702, 1e-05
  %v719 = vadd.f32 %v703, 1e-05
  %v720 = vadd.f32 %v704, 1e-05
  %v721 = vadd.f32 %v705, 1e-05
  %v722 = vadd.f32 %v706, 1e-05
  %v723 = vadd.f32 %v707, 1e-05
  %v724 = vadd.f32 %v708, 1e-05
  %v725 = vadd.f32 %v709, 1e-05
  %v726 = vrsqrt.pop %v710
  %v727 = vrsqrt.pop %v711
  %v728 = vrsqrt.pop %v712
  %v729 = vrsqrt.pop %v713
  %v730 = vrsqrt.pop %v714
  %v731 = vrsqrt.pop %v715
  %v732 = vrsqrt.pop %v716
  %v733 = vrsqrt.pop %v717
  %v734 = vrsqrt.pop %v718
  %v735 = vrsqrt.pop %v719
  %v736 = vrsqrt.pop %v720
  %v737 = vrsqrt.pop %v721
  %v738 = vrsqrt.pop %v722
  %v739 = vrsqrt.pop %v723
  %v740 = vrsqrt.pop %v724
  %v741 = vrsqrt.pop %v725
  %v742 = vmul.f32 %v550, %v726
  %v743 = vmul.f32 %v551, %v727
  %v744 = vmul.f32 %v552, %v728
  %v745 = vmul.f32 %v553, %v729
  %v746 = vmul.f32 %v554, %v730
  %v747 = vmul.f32 %v555, %v731
  %v748 = vmul.f32 %v556, %v732
  %v749 = vmul.f32 %v557, %v733
  %v750 = vmul.f32 %v558, %v734
  %v751 = vmul.f32 %v559, %v735
  %v752 = vmul.f32 %v560, %v736
  %v753 = vmul.f32 %v561, %v737
  %v754 = vmul.f32 %v562, %v738
  %v755 = vmul.f32 %v563, %v739
  %v756 = vmul.f32 %v564, %v740
  %v757 = vmul.f32 %v565, %v741
  %758 = vrot.lane.b32.xlu0 %v150, 96
  %v759 = vpop.permute.xlu0 %758
  %760 = vrot.lane.b32.xlu0 %v153, 96
  %v761 = vpop.permute.xlu0 %760
  %762 = vrot.lane.b32.xlu0 %v158, 96
  %v763 = vpop.permute.xlu0 %762
  %764 = vrot.lane.b32.xlu0 %v161, 96
  %v765 = vpop.permute.xlu0 %764
  %766 = vrot.lane.b32.xlu0 %v166, 96
  %v767 = vpop.permute.xlu0 %766
  %768 = vrot.lane.b32.xlu0 %v169, 96
  %v769 = vpop.permute.xlu0 %768
  %770 = vrot.lane.b32.xlu0 %v174, 96
  %v771 = vpop.permute.xlu0 %770
  %772 = vrot.lane.b32.xlu0 %v177, 96
  %v773 = vpop.permute.xlu0 %772
  %774 = vrot.lane.b32.xlu0 %v182, 96
  %v775 = vpop.permute.xlu0 %774
  %776 = vrot.lane.b32.xlu0 %v185, 96
  %v777 = vpop.permute.xlu0 %776
  %778 = vrot.lane.b32.xlu0 %v190, 96
  %v779 = vpop.permute.xlu0 %778
  %780 = vrot.lane.b32.xlu0 %v193, 96
  %v781 = vpop.permute.xlu0 %780
  %782 = vrot.lane.b32.xlu0 %v198, 96
  %v783 = vpop.permute.xlu0 %782
  %784 = vrot.lane.b32.xlu0 %v201, 96
  %v785 = vpop.permute.xlu0 %784
  %786 = vrot.lane.b32.xlu0 %v206, 96
  %v787 = vpop.permute.xlu0 %786
  %788 = vrot.lane.b32.xlu0 %v209, 96
  %v789 = vpop.permute.xlu0 %788
  %v806 = vsel %vm212, %v759, 0.0
  %807 = vadd.xlane.f32.xlu0 %v806
  %v808 = vpop.xlane.xlu0 %807
  %v809 = vsel %vm212, %v761, 0.0
  %810 = vadd.xlane.f32.xlu0 %v809
  %v811 = vpop.xlane.xlu0 %810
  %v812 = vsel %vm212, %v763, 0.0
  %813 = vadd.xlane.f32.xlu0 %v812
  %v814 = vpop.xlane.xlu0 %813
  %v815 = vsel %vm212, %v765, 0.0
  %816 = vadd.xlane.f32.xlu0 %v815
  %v817 = vpop.xlane.xlu0 %816
  %v818 = vsel %vm212, %v767, 0.0
  %819 = vadd.xlane.f32.xlu0 %v818
  %v820 = vpop.xlane.xlu0 %819
  %v821 = vsel %vm212, %v769, 0.0
  %822 = vadd.xlane.f32.xlu0 %v821
  %v823 = vpop.xlane.xlu0 %822
  %v824 = vsel %vm212, %v771, 0.0
  %825 = vadd.xlane.f32.xlu0 %v824
  %v826 = vpop.xlane.xlu0 %825
  %v827 = vsel %vm212, %v773, 0.0
  %828 = vadd.xlane.f32.xlu0 %v827
  %v829 = vpop.xlane.xlu0 %828
  %v830 = vsel %vm212, %v775, 0.0
  %831 = vadd.xlane.f32.xlu0 %v830
  %v832 = vpop.xlane.xlu0 %831
  %v833 = vsel %vm212, %v777, 0.0
  %834 = vadd.xlane.f32.xlu0 %v833
  %v835 = vpop.xlane.xlu0 %834
  %v836 = vsel %vm212, %v779, 0.0
  %837 = vadd.xlane.f32.xlu0 %v836
  %v838 = vpop.xlane.xlu0 %837
  %v839 = vsel %vm212, %v781, 0.0
  %840 = vadd.xlane.f32.xlu0 %v839
  %v841 = vpop.xlane.xlu0 %840
  %v842 = vsel %vm212, %v783, 0.0
  %843 = vadd.xlane.f32.xlu0 %v842
  %v844 = vpop.xlane.xlu0 %843
  %v845 = vsel %vm212, %v785, 0.0
  %846 = vadd.xlane.f32.xlu0 %v845
  %v847 = vpop.xlane.xlu0 %846
  %v848 = vsel %vm212, %v787, 0.0
  %849 = vadd.xlane.f32.xlu0 %v848
  %v850 = vpop.xlane.xlu0 %849
  %v851 = vsel %vm212, %v789, 0.0
  %852 = vadd.xlane.f32.xlu0 %v851
  %v853 = vpop.xlane.xlu0 %852
  %v854 = vmul.f32 %v808, %v261
  %v855 = vmul.f32 %v811, %v261
  %v856 = vmul.f32 %v814, %v261
  %v857 = vmul.f32 %v817, %v261
  %v858 = vmul.f32 %v820, %v261
  %v859 = vmul.f32 %v823, %v261
  %v860 = vmul.f32 %v826, %v261
  %v861 = vmul.f32 %v829, %v261
  %v862 = vmul.f32 %v832, %v261
  %v863 = vmul.f32 %v835, %v261
  %v864 = vmul.f32 %v838, %v261
  %v865 = vmul.f32 %v841, %v261
  %v866 = vmul.f32 %v844, %v261
  %v867 = vmul.f32 %v847, %v261
  %v868 = vmul.f32 %v850, %v261
  %v869 = vmul.f32 %v853, %v261
  %v870 = vsub.f32 %v150, %v854
  %v871 = vsub.f32 %v153, %v855
  %v872 = vsub.f32 %v158, %v856
  %v873 = vsub.f32 %v161, %v857
  %v874 = vsub.f32 %v166, %v858
  %v875 = vsub.f32 %v169, %v859
  %v876 = vsub.f32 %v174, %v860
  %v877 = vsub.f32 %v177, %v861
  %v878 = vsub.f32 %v182, %v862
  %v879 = vsub.f32 %v185, %v863
  %v880 = vsub.f32 %v190, %v864
  %v881 = vsub.f32 %v193, %v865
  %v882 = vsub.f32 %v198, %v866
  %v883 = vsub.f32 %v201, %v867
  %v884 = vsub.f32 %v206, %v868
  %v885 = vsub.f32 %v209, %v869
  %v886 = vmul.f32 %v870, %v870
  %v887 = vmul.f32 %v871, %v871
  %v888 = vmul.f32 %v872, %v872
  %v889 = vmul.f32 %v873, %v873
  %v890 = vmul.f32 %v874, %v874
  %v891 = vmul.f32 %v875, %v875
  %v892 = vmul.f32 %v876, %v876
  %v893 = vmul.f32 %v877, %v877
  %v894 = vmul.f32 %v878, %v878
  %v895 = vmul.f32 %v879, %v879
  %v896 = vmul.f32 %v880, %v880
  %v897 = vmul.f32 %v881, %v881
  %v898 = vmul.f32 %v882, %v882
  %v899 = vmul.f32 %v883, %v883
  %v900 = vmul.f32 %v884, %v884
  %v901 = vmul.f32 %v885, %v885
  %918 = vrot.lane.b32.xlu0 %v886, 96
  %v919 = vpop.permute.xlu0 %918
  %920 = vrot.lane.b32.xlu0 %v887, 96
  %v921 = vpop.permute.xlu0 %920
  %922 = vrot.lane.b32.xlu0 %v888, 96
  %v923 = vpop.permute.xlu0 %922
  %924 = vrot.lane.b32.xlu0 %v889, 96
  %v925 = vpop.permute.xlu0 %924
  %926 = vrot.lane.b32.xlu0 %v890, 96
  %v927 = vpop.permute.xlu0 %926
  %928 = vrot.lane.b32.xlu0 %v891, 96
  %v929 = vpop.permute.xlu0 %928
  %930 = vrot.lane.b32.xlu0 %v892, 96
  %v931 = vpop.permute.xlu0 %930
  %932 = vrot.lane.b32.xlu0 %v893, 96
  %v933 = vpop.permute.xlu0 %932
  %934 = vrot.lane.b32.xlu0 %v894, 96
  %v935 = vpop.permute.xlu0 %934
  %936 = vrot.lane.b32.xlu0 %v895, 96
  %v937 = vpop.permute.xlu0 %936
  %938 = vrot.lane.b32.xlu0 %v896, 96
  %v939 = vpop.permute.xlu0 %938
  %940 = vrot.lane.b32.xlu0 %v897, 96
  %v941 = vpop.permute.xlu0 %940
  %942 = vrot.lane.b32.xlu0 %v898, 96
  %v943 = vpop.permute.xlu0 %942
  %944 = vrot.lane.b32.xlu0 %v899, 96
  %v945 = vpop.permute.xlu0 %944
  %946 = vrot.lane.b32.xlu0 %v900, 96
  %v947 = vpop.permute.xlu0 %946
  %948 = vrot.lane.b32.xlu0 %v901, 96
  %v949 = vpop.permute.xlu0 %948
  %v966 = vsel %vm212, %v919, 0.0
  %967 = vadd.xlane.f32.xlu0 %v966
  %v968 = vpop.xlane.xlu0 %967
  %v969 = vsel %vm212, %v921, 0.0
  %970 = vadd.xlane.f32.xlu0 %v969
  %v971 = vpop.xlane.xlu0 %970
  %v972 = vsel %vm212, %v923, 0.0
  %973 = vadd.xlane.f32.xlu0 %v972
  %v974 = vpop.xlane.xlu0 %973
  %v975 = vsel %vm212, %v925, 0.0
  %976 = vadd.xlane.f32.xlu0 %v975
  %v977 = vpop.xlane.xlu0 %976
  %v978 = vsel %vm212, %v927, 0.0
  %979 = vadd.xlane.f32.xlu0 %v978
  %v980 = vpop.xlane.xlu0 %979
  %v981 = vsel %vm212, %v929, 0.0
  %982 = vadd.xlane.f32.xlu0 %v981
  %v983 = vpop.xlane.xlu0 %982
  %v984 = vsel %vm212, %v931, 0.0
  %985 = vadd.xlane.f32.xlu0 %v984
  %v986 = vpop.xlane.xlu0 %985
  %v987 = vsel %vm212, %v933, 0.0
  %988 = vadd.xlane.f32.xlu0 %v987
  %v989 = vpop.xlane.xlu0 %988
  %v990 = vsel %vm212, %v935, 0.0
  %991 = vadd.xlane.f32.xlu0 %v990
  %v992 = vpop.xlane.xlu0 %991
  %v993 = vsel %vm212, %v937, 0.0
  %994 = vadd.xlane.f32.xlu0 %v993
  %v995 = vpop.xlane.xlu0 %994
  %v996 = vsel %vm212, %v939, 0.0
  %997 = vadd.xlane.f32.xlu0 %v996
  %v998 = vpop.xlane.xlu0 %997
  %v999 = vsel %vm212, %v941, 0.0
  %1000 = vadd.xlane.f32.xlu0 %v999
  %v1001 = vpop.xlane.xlu0 %1000
  %v1002 = vsel %vm212, %v943, 0.0
  %1003 = vadd.xlane.f32.xlu0 %v1002
  %v1004 = vpop.xlane.xlu0 %1003
  %v1005 = vsel %vm212, %v945, 0.0
  %1006 = vadd.xlane.f32.xlu0 %v1005
  %v1007 = vpop.xlane.xlu0 %1006
  %v1008 = vsel %vm212, %v947, 0.0
  %1009 = vadd.xlane.f32.xlu0 %v1008
  %v1010 = vpop.xlane.xlu0 %1009
  %v1011 = vsel %vm212, %v949, 0.0
  %1012 = vadd.xlane.f32.xlu0 %v1011
  %v1013 = vpop.xlane.xlu0 %1012
  %v1014 = vmul.f32 %v968, %v261
  %v1015 = vmul.f32 %v971, %v261
  %v1016 = vmul.f32 %v974, %v261
  %v1017 = vmul.f32 %v977, %v261
  %v1018 = vmul.f32 %v980, %v261
  %v1019 = vmul.f32 %v983, %v261
  %v1020 = vmul.f32 %v986, %v261
  %v1021 = vmul.f32 %v989, %v261
  %v1022 = vmul.f32 %v992, %v261
  %v1023 = vmul.f32 %v995, %v261
  %v1024 = vmul.f32 %v998, %v261
  %v1025 = vmul.f32 %v1001, %v261
  %v1026 = vmul.f32 %v1004, %v261
  %v1027 = vmul.f32 %v1007, %v261
  %v1028 = vmul.f32 %v1010, %v261
  %v1029 = vmul.f32 %v1013, %v261
  %v1030 = vadd.f32 %v1014, 1e-05
  %v1031 = vadd.f32 %v1015, 1e-05
  %v1032 = vadd.f32 %v1016, 1e-05
  %v1033 = vadd.f32 %v1017, 1e-05
  %v1034 = vadd.f32 %v1018, 1e-05
  %v1035 = vadd.f32 %v1019, 1e-05
  %v1036 = vadd.f32 %v1020, 1e-05
  %v1037 = vadd.f32 %v1021, 1e-05
  %v1038 = vadd.f32 %v1022, 1e-05
  %v1039 = vadd.f32 %v1023, 1e-05
  %v1040 = vadd.f32 %v1024, 1e-05
  %v1041 = vadd.f32 %v1025, 1e-05
  %v1042 = vadd.f32 %v1026, 1e-05
  %v1043 = vadd.f32 %v1027, 1e-05
  %v1044 = vadd.f32 %v1028, 1e-05
  %v1045 = vadd.f32 %v1029, 1e-05
  %v1046 = vrsqrt.pop %v1030
  %v1047 = vrsqrt.pop %v1031
  %v1048 = vrsqrt.pop %v1032
  %v1049 = vrsqrt.pop %v1033
  %v1050 = vrsqrt.pop %v1034
  %v1051 = vrsqrt.pop %v1035
  %v1052 = vrsqrt.pop %v1036
  %v1053 = vrsqrt.pop %v1037
  %v1054 = vrsqrt.pop %v1038
  %v1055 = vrsqrt.pop %v1039
  %v1056 = vrsqrt.pop %v1040
  %v1057 = vrsqrt.pop %v1041
  %v1058 = vrsqrt.pop %v1042
  %v1059 = vrsqrt.pop %v1043
  %v1060 = vrsqrt.pop %v1044
  %v1061 = vrsqrt.pop %v1045
  %v1062 = vmul.f32 %v870, %v1046
  %v1063 = vmul.f32 %v871, %v1047
  %v1064 = vmul.f32 %v872, %v1048
  %v1065 = vmul.f32 %v873, %v1049
  %v1066 = vmul.f32 %v874, %v1050
  %v1067 = vmul.f32 %v875, %v1051
  %v1068 = vmul.f32 %v876, %v1052
  %v1069 = vmul.f32 %v877, %v1053
  %v1070 = vmul.f32 %v878, %v1054
  %v1071 = vmul.f32 %v879, %v1055
  %v1072 = vmul.f32 %v880, %v1056
  %v1073 = vmul.f32 %v881, %v1057
  %v1074 = vmul.f32 %v882, %v1058
  %v1075 = vmul.f32 %v883, %v1059
  %v1076 = vmul.f32 %v884, %v1060
  %v1077 = vmul.f32 %v885, %v1061
  %1078 = vrot.lane.b32.xlu0 %v150, 80
  %v1079 = vpop.permute.xlu0 %1078
  %1080 = vrot.lane.b32.xlu0 %v153, 80
  %v1081 = vpop.permute.xlu0 %1080
  %1082 = vrot.lane.b32.xlu0 %v158, 80
  %v1083 = vpop.permute.xlu0 %1082
  %1084 = vrot.lane.b32.xlu0 %v161, 80
  %v1085 = vpop.permute.xlu0 %1084
  %1086 = vrot.lane.b32.xlu0 %v166, 80
  %v1087 = vpop.permute.xlu0 %1086
  %1088 = vrot.lane.b32.xlu0 %v169, 80
  %v1089 = vpop.permute.xlu0 %1088
  %1090 = vrot.lane.b32.xlu0 %v174, 80
  %v1091 = vpop.permute.xlu0 %1090
  %1092 = vrot.lane.b32.xlu0 %v177, 80
  %v1093 = vpop.permute.xlu0 %1092
  %1094 = vrot.lane.b32.xlu0 %v182, 80
  %v1095 = vpop.permute.xlu0 %1094
  %1096 = vrot.lane.b32.xlu0 %v185, 80
  %v1097 = vpop.permute.xlu0 %1096
  %1098 = vrot.lane.b32.xlu0 %v190, 80
  %v1099 = vpop.permute.xlu0 %1098
  %1100 = vrot.lane.b32.xlu0 %v193, 80
  %v1101 = vpop.permute.xlu0 %1100
  %1102 = vrot.lane.b32.xlu0 %v198, 80
  %v1103 = vpop.permute.xlu0 %1102
  %1104 = vrot.lane.b32.xlu0 %v201, 80
  %v1105 = vpop.permute.xlu0 %1104
  %1106 = vrot.lane.b32.xlu0 %v206, 80
  %v1107 = vpop.permute.xlu0 %1106
  %1108 = vrot.lane.b32.xlu0 %v209, 80
  %v1109 = vpop.permute.xlu0 %1108
  %v1126 = vsel %vm212, %v1079, 0.0
  %1127 = vadd.xlane.f32.xlu0 %v1126
  %v1128 = vpop.xlane.xlu0 %1127
  %v1129 = vsel %vm212, %v1081, 0.0
  %1130 = vadd.xlane.f32.xlu0 %v1129
  %v1131 = vpop.xlane.xlu0 %1130
  %v1132 = vsel %vm212, %v1083, 0.0
  %1133 = vadd.xlane.f32.xlu0 %v1132
  %v1134 = vpop.xlane.xlu0 %1133
  %v1135 = vsel %vm212, %v1085, 0.0
  %1136 = vadd.xlane.f32.xlu0 %v1135
  %v1137 = vpop.xlane.xlu0 %1136
  %v1138 = vsel %vm212, %v1087, 0.0
  %1139 = vadd.xlane.f32.xlu0 %v1138
  %v1140 = vpop.xlane.xlu0 %1139
  %v1141 = vsel %vm212, %v1089, 0.0
  %1142 = vadd.xlane.f32.xlu0 %v1141
  %v1143 = vpop.xlane.xlu0 %1142
  %v1144 = vsel %vm212, %v1091, 0.0
  %1145 = vadd.xlane.f32.xlu0 %v1144
  %v1146 = vpop.xlane.xlu0 %1145
  %v1147 = vsel %vm212, %v1093, 0.0
  %1148 = vadd.xlane.f32.xlu0 %v1147
  %v1149 = vpop.xlane.xlu0 %1148
  %v1150 = vsel %vm212, %v1095, 0.0
  %1151 = vadd.xlane.f32.xlu0 %v1150
  %v1152 = vpop.xlane.xlu0 %1151
  %v1153 = vsel %vm212, %v1097, 0.0
  %1154 = vadd.xlane.f32.xlu0 %v1153
  %v1155 = vpop.xlane.xlu0 %1154
  %v1156 = vsel %vm212, %v1099, 0.0
  %1157 = vadd.xlane.f32.xlu0 %v1156
  %v1158 = vpop.xlane.xlu0 %1157
  %v1159 = vsel %vm212, %v1101, 0.0
  %1160 = vadd.xlane.f32.xlu0 %v1159
  %v1161 = vpop.xlane.xlu0 %1160
  %v1162 = vsel %vm212, %v1103, 0.0
  %1163 = vadd.xlane.f32.xlu0 %v1162
  %v1164 = vpop.xlane.xlu0 %1163
  %v1165 = vsel %vm212, %v1105, 0.0
  %1166 = vadd.xlane.f32.xlu0 %v1165
  %v1167 = vpop.xlane.xlu0 %1166
  %v1168 = vsel %vm212, %v1107, 0.0
  %1169 = vadd.xlane.f32.xlu0 %v1168
  %v1170 = vpop.xlane.xlu0 %1169
  %v1171 = vsel %vm212, %v1109, 0.0
  %1172 = vadd.xlane.f32.xlu0 %v1171
  %v1173 = vpop.xlane.xlu0 %1172
  %v1174 = vmul.f32 %v1128, %v261
  %v1175 = vmul.f32 %v1131, %v261
  %v1176 = vmul.f32 %v1134, %v261
  %v1177 = vmul.f32 %v1137, %v261
  %v1178 = vmul.f32 %v1140, %v261
  %v1179 = vmul.f32 %v1143, %v261
  %v1180 = vmul.f32 %v1146, %v261
  %v1181 = vmul.f32 %v1149, %v261
  %v1182 = vmul.f32 %v1152, %v261
  %v1183 = vmul.f32 %v1155, %v261
  %v1184 = vmul.f32 %v1158, %v261
  %v1185 = vmul.f32 %v1161, %v261
  %v1186 = vmul.f32 %v1164, %v261
  %v1187 = vmul.f32 %v1167, %v261
  %v1188 = vmul.f32 %v1170, %v261
  %v1189 = vmul.f32 %v1173, %v261
  %v1190 = vsub.f32 %v150, %v1174
  %v1191 = vsub.f32 %v153, %v1175
  %v1192 = vsub.f32 %v158, %v1176
  %v1193 = vsub.f32 %v161, %v1177
  %v1194 = vsub.f32 %v166, %v1178
  %v1195 = vsub.f32 %v169, %v1179
  %v1196 = vsub.f32 %v174, %v1180
  %v1197 = vsub.f32 %v177, %v1181
  %v1198 = vsub.f32 %v182, %v1182
  %v1199 = vsub.f32 %v185, %v1183
  %v1200 = vsub.f32 %v190, %v1184
  %v1201 = vsub.f32 %v193, %v1185
  %v1202 = vsub.f32 %v198, %v1186
  %v1203 = vsub.f32 %v201, %v1187
  %v1204 = vsub.f32 %v206, %v1188
  %v1205 = vsub.f32 %v209, %v1189
  %v1206 = vmul.f32 %v1190, %v1190
  %v1207 = vmul.f32 %v1191, %v1191
  %v1208 = vmul.f32 %v1192, %v1192
  %v1209 = vmul.f32 %v1193, %v1193
  %v1210 = vmul.f32 %v1194, %v1194
  %v1211 = vmul.f32 %v1195, %v1195
  %v1212 = vmul.f32 %v1196, %v1196
  %v1213 = vmul.f32 %v1197, %v1197
  %v1214 = vmul.f32 %v1198, %v1198
  %v1215 = vmul.f32 %v1199, %v1199
  %v1216 = vmul.f32 %v1200, %v1200
  %v1217 = vmul.f32 %v1201, %v1201
  %v1218 = vmul.f32 %v1202, %v1202
  %v1219 = vmul.f32 %v1203, %v1203
  %v1220 = vmul.f32 %v1204, %v1204
  %v1221 = vmul.f32 %v1205, %v1205
  %1238 = vrot.lane.b32.xlu0 %v1206, 80
  %v1239 = vpop.permute.xlu0 %1238
  %1240 = vrot.lane.b32.xlu0 %v1207, 80
  %v1241 = vpop.permute.xlu0 %1240
  %1242 = vrot.lane.b32.xlu0 %v1208, 80
  %v1243 = vpop.permute.xlu0 %1242
  %1244 = vrot.lane.b32.xlu0 %v1209, 80
  %v1245 = vpop.permute.xlu0 %1244
  %1246 = vrot.lane.b32.xlu0 %v1210, 80
  %v1247 = vpop.permute.xlu0 %1246
  %1248 = vrot.lane.b32.xlu0 %v1211, 80
  %v1249 = vpop.permute.xlu0 %1248
  %1250 = vrot.lane.b32.xlu0 %v1212, 80
  %v1251 = vpop.permute.xlu0 %1250
  %1252 = vrot.lane.b32.xlu0 %v1213, 80
  %v1253 = vpop.permute.xlu0 %1252
  %1254 = vrot.lane.b32.xlu0 %v1214, 80
  %v1255 = vpop.permute.xlu0 %1254
  %1256 = vrot.lane.b32.xlu0 %v1215, 80
  %v1257 = vpop.permute.xlu0 %1256
  %1258 = vrot.lane.b32.xlu0 %v1216, 80
  %v1259 = vpop.permute.xlu0 %1258
  %1260 = vrot.lane.b32.xlu0 %v1217, 80
  %v1261 = vpop.permute.xlu0 %1260
  %1262 = vrot.lane.b32.xlu0 %v1218, 80
  %v1263 = vpop.permute.xlu0 %1262
  %1264 = vrot.lane.b32.xlu0 %v1219, 80
  %v1265 = vpop.permute.xlu0 %1264
  %1266 = vrot.lane.b32.xlu0 %v1220, 80
  %v1267 = vpop.permute.xlu0 %1266
  %1268 = vrot.lane.b32.xlu0 %v1221, 80
  %v1269 = vpop.permute.xlu0 %1268
  %v1286 = vsel %vm212, %v1239, 0.0
  %1287 = vadd.xlane.f32.xlu0 %v1286
  %v1288 = vpop.xlane.xlu0 %1287
  %v1289 = vsel %vm212, %v1241, 0.0
  %1290 = vadd.xlane.f32.xlu0 %v1289
  %v1291 = vpop.xlane.xlu0 %1290
  %v1292 = vsel %vm212, %v1243, 0.0
  %1293 = vadd.xlane.f32.xlu0 %v1292
  %v1294 = vpop.xlane.xlu0 %1293
  %v1295 = vsel %vm212, %v1245, 0.0
  %1296 = vadd.xlane.f32.xlu0 %v1295
  %v1297 = vpop.xlane.xlu0 %1296
  %v1298 = vsel %vm212, %v1247, 0.0
  %1299 = vadd.xlane.f32.xlu0 %v1298
  %v1300 = vpop.xlane.xlu0 %1299
  %v1301 = vsel %vm212, %v1249, 0.0
  %1302 = vadd.xlane.f32.xlu0 %v1301
  %v1303 = vpop.xlane.xlu0 %1302
  %v1304 = vsel %vm212, %v1251, 0.0
  %1305 = vadd.xlane.f32.xlu0 %v1304
  %v1306 = vpop.xlane.xlu0 %1305
  %v1307 = vsel %vm212, %v1253, 0.0
  %1308 = vadd.xlane.f32.xlu0 %v1307
  %v1309 = vpop.xlane.xlu0 %1308
  %v1310 = vsel %vm212, %v1255, 0.0
  %1311 = vadd.xlane.f32.xlu0 %v1310
  %v1312 = vpop.xlane.xlu0 %1311
  %v1313 = vsel %vm212, %v1257, 0.0
  %1314 = vadd.xlane.f32.xlu0 %v1313
  %v1315 = vpop.xlane.xlu0 %1314
  %v1316 = vsel %vm212, %v1259, 0.0
  %1317 = vadd.xlane.f32.xlu0 %v1316
  %v1318 = vpop.xlane.xlu0 %1317
  %v1319 = vsel %vm212, %v1261, 0.0
  %1320 = vadd.xlane.f32.xlu0 %v1319
  %v1321 = vpop.xlane.xlu0 %1320
  %v1322 = vsel %vm212, %v1263, 0.0
  %1323 = vadd.xlane.f32.xlu0 %v1322
  %v1324 = vpop.xlane.xlu0 %1323
  %v1325 = vsel %vm212, %v1265, 0.0
  %1326 = vadd.xlane.f32.xlu0 %v1325
  %v1327 = vpop.xlane.xlu0 %1326
  %v1328 = vsel %vm212, %v1267, 0.0
  %1329 = vadd.xlane.f32.xlu0 %v1328
  %v1330 = vpop.xlane.xlu0 %1329
  %v1331 = vsel %vm212, %v1269, 0.0
  %1332 = vadd.xlane.f32.xlu0 %v1331
  %v1333 = vpop.xlane.xlu0 %1332
  %v1334 = vmul.f32 %v1288, %v261
  %v1335 = vmul.f32 %v1291, %v261
  %v1336 = vmul.f32 %v1294, %v261
  %v1337 = vmul.f32 %v1297, %v261
  %v1338 = vmul.f32 %v1300, %v261
  %v1339 = vmul.f32 %v1303, %v261
  %v1340 = vmul.f32 %v1306, %v261
  %v1341 = vmul.f32 %v1309, %v261
  %v1342 = vmul.f32 %v1312, %v261
  %v1343 = vmul.f32 %v1315, %v261
  %v1344 = vmul.f32 %v1318, %v261
  %v1345 = vmul.f32 %v1321, %v261
  %v1346 = vmul.f32 %v1324, %v261
  %v1347 = vmul.f32 %v1327, %v261
  %v1348 = vmul.f32 %v1330, %v261
  %v1349 = vmul.f32 %v1333, %v261
  %v1350 = vadd.f32 %v1334, 1e-05
  %v1351 = vadd.f32 %v1335, 1e-05
  %v1352 = vadd.f32 %v1336, 1e-05
  %v1353 = vadd.f32 %v1337, 1e-05
  %v1354 = vadd.f32 %v1338, 1e-05
  %v1355 = vadd.f32 %v1339, 1e-05
  %v1356 = vadd.f32 %v1340, 1e-05
  %v1357 = vadd.f32 %v1341, 1e-05
  %v1358 = vadd.f32 %v1342, 1e-05
  %v1359 = vadd.f32 %v1343, 1e-05
  %v1360 = vadd.f32 %v1344, 1e-05
  %v1361 = vadd.f32 %v1345, 1e-05
  %v1362 = vadd.f32 %v1346, 1e-05
  %v1363 = vadd.f32 %v1347, 1e-05
  %v1364 = vadd.f32 %v1348, 1e-05
  %v1365 = vadd.f32 %v1349, 1e-05
  %v1366 = vrsqrt.pop %v1350
  %v1367 = vrsqrt.pop %v1351
  %v1368 = vrsqrt.pop %v1352
  %v1369 = vrsqrt.pop %v1353
  %v1370 = vrsqrt.pop %v1354
  %v1371 = vrsqrt.pop %v1355
  %v1372 = vrsqrt.pop %v1356
  %v1373 = vrsqrt.pop %v1357
  %v1374 = vrsqrt.pop %v1358
  %v1375 = vrsqrt.pop %v1359
  %v1376 = vrsqrt.pop %v1360
  %v1377 = vrsqrt.pop %v1361
  %v1378 = vrsqrt.pop %v1362
  %v1379 = vrsqrt.pop %v1363
  %v1380 = vrsqrt.pop %v1364
  %v1381 = vrsqrt.pop %v1365
  %v1382 = vmul.f32 %v1190, %v1366
  %v1383 = vmul.f32 %v1191, %v1367
  %v1384 = vmul.f32 %v1192, %v1368
  %v1385 = vmul.f32 %v1193, %v1369
  %v1386 = vmul.f32 %v1194, %v1370
  %v1387 = vmul.f32 %v1195, %v1371
  %v1388 = vmul.f32 %v1196, %v1372
  %v1389 = vmul.f32 %v1197, %v1373
  %v1390 = vmul.f32 %v1198, %v1374
  %v1391 = vmul.f32 %v1199, %v1375
  %v1392 = vmul.f32 %v1200, %v1376
  %v1393 = vmul.f32 %v1201, %v1377
  %v1394 = vmul.f32 %v1202, %v1378
  %v1395 = vmul.f32 %v1203, %v1379
  %v1396 = vmul.f32 %v1204, %v1380
  %v1397 = vmul.f32 %v1205, %v1381
  %v1398 = vsel %vm212, %v406, %v742
  %v1399 = vsel %vm212, %v407, %v743
  %v1400 = vsel %vm212, %v408, %v744
  %v1401 = vsel %vm212, %v409, %v745
  %v1402 = vsel %vm212, %v410, %v746
  %v1403 = vsel %vm212, %v411, %v747
  %v1404 = vsel %vm212, %v412, %v748
  %v1405 = vsel %vm212, %v413, %v749
  %v1406 = vsel %vm212, %v414, %v750
  %v1407 = vsel %vm212, %v415, %v751
  %v1408 = vsel %vm212, %v416, %v752
  %v1409 = vsel %vm212, %v417, %v753
  %v1410 = vsel %vm212, %v418, %v754
  %v1411 = vsel %vm212, %v419, %v755
  %v1412 = vsel %vm212, %v420, %v756
  %v1413 = vsel %vm212, %v421, %v757
  %v1414 = vsel %vm90, %v1398, %v1062
  %v1415 = vsel %vm90, %v1399, %v1063
  %v1416 = vsel %vm90, %v1400, %v1064
  %v1417 = vsel %vm90, %v1401, %v1065
  %v1418 = vsel %vm90, %v1402, %v1066
  %v1419 = vsel %vm90, %v1403, %v1067
  %v1420 = vsel %vm90, %v1404, %v1068
  %v1421 = vsel %vm90, %v1405, %v1069
  %v1422 = vsel %vm90, %v1406, %v1070
  %v1423 = vsel %vm90, %v1407, %v1071
  %v1424 = vsel %vm90, %v1408, %v1072
  %v1425 = vsel %vm90, %v1409, %v1073
  %v1426 = vsel %vm90, %v1410, %v1074
  %v1427 = vsel %vm90, %v1411, %v1075
  %v1428 = vsel %vm90, %v1412, %v1076
  %v1429 = vsel %vm90, %v1413, %v1077
  %vm1430 = vcmask 392192
  %v1431 = vsel %vm1430, %v1414, %v1382
  %v1432 = vsel %vm1430, %v1415, %v1383
  %v1433 = vsel %vm1430, %v1416, %v1384
  %v1434 = vsel %vm1430, %v1417, %v1385
  %v1435 = vsel %vm1430, %v1418, %v1386
  %v1436 = vsel %vm1430, %v1419, %v1387
  %v1437 = vsel %vm1430, %v1420, %v1388
  %v1438 = vsel %vm1430, %v1421, %v1389
  %v1439 = vsel %vm1430, %v1422, %v1390
  %v1440 = vsel %vm1430, %v1423, %v1391
  %v1441 = vsel %vm1430, %v1424, %v1392
  %v1442 = vsel %vm1430, %v1425, %v1393
  %v1443 = vsel %vm1430, %v1426, %v1394
  %v1444 = vsel %vm1430, %v1427, %v1395
  %v1445 = vsel %vm1430, %v1428, %v1396
  %v1446 = vsel %vm1430, %v1429, %v1397
  %v1447 = vld [vmem:[%s2] sm:$0x1]
  %v1449 = vlaneseq
  %v1450 = vshrl.u32 %v1449, 7
  %v1451 = vsub.s32 0, %v1450
  %v1452 = vrot.slane %v1447, %v1451
  %v1454 = vmul.f32 %v1431, %v1452
  %v1455 = vmul.f32 %v1432, %v1452
  %v1456 = vmul.f32 %v1433, %v1452
  %v1457 = vmul.f32 %v1434, %v1452
  %v1458 = vmul.f32 %v1435, %v1452
  %v1459 = vmul.f32 %v1436, %v1452
  %v1460 = vmul.f32 %v1437, %v1452
  %v1461 = vmul.f32 %v1438, %v1452
  %v1462 = vmul.f32 %v1439, %v1452
  %v1463 = vmul.f32 %v1440, %v1452
  %v1464 = vmul.f32 %v1441, %v1452
  %v1465 = vmul.f32 %v1442, %v1452
  %v1466 = vmul.f32 %v1443, %v1452
  %v1467 = vmul.f32 %v1444, %v1452
  %v1468 = vmul.f32 %v1445, %v1452
  %v1469 = vmul.f32 %v1446, %v1452
  %v1470 = vld [vmem:[%s3] sm:$0x1]
  %v1472 = vlaneseq
  %v1473 = vshrl.u32 %v1472, 7
  %v1474 = vsub.s32 0, %v1473
  %v1475 = vrot.slane %v1470, %v1474
  %v1477 = vadd.f32 %v1454, %v1475
  %v1478 = vadd.f32 %v1455, %v1475
  %v1479 = vadd.f32 %v1456, %v1475
  %v1480 = vadd.f32 %v1457, %v1475
  %v1481 = vadd.f32 %v1458, %v1475
  %v1482 = vadd.f32 %v1459, %v1475
  %v1483 = vadd.f32 %v1460, %v1475
  %v1484 = vadd.f32 %v1461, %v1475
  %v1485 = vadd.f32 %v1462, %v1475
  %v1486 = vadd.f32 %v1463, %v1475
  %v1487 = vadd.f32 %v1464, %v1475
  %v1488 = vadd.f32 %v1465, %v1475
  %v1489 = vadd.f32 %v1466, %v1475
  %v1490 = vadd.f32 %v1467, %v1475
  %v1491 = vadd.f32 %v1468, %v1475
  %v1492 = vadd.f32 %v1469, %v1475
  %vm1493 = vcmask 523264
  %1494 = vst.msk [vmem:[%s4] sm:$0xff] %vm1493, %v1477
  %1495 = vst.msk [vmem:[%s4 + $0x8] sm:$0xff] %vm1493, %v1478
  %1496 = vst.msk [vmem:[%s4 + $0x10] sm:$0xff] %vm1493, %v1479
  %1497 = vst.msk [vmem:[%s4 + $0x18] sm:$0xff] %vm1493, %v1480
  %1498 = vst.msk [vmem:[%s4 + $0x20] sm:$0xff] %vm1493, %v1481
  %1499 = vst.msk [vmem:[%s4 + $0x28] sm:$0xff] %vm1493, %v1482
  %1500 = vst.msk [vmem:[%s4 + $0x30] sm:$0xff] %vm1493, %v1483
  %1501 = vst.msk [vmem:[%s4 + $0x38] sm:$0xff] %vm1493, %v1484
  %1502 = vst.msk [vmem:[%s4 + $0x40] sm:$0xff] %vm1493, %v1485
  %1503 = vst.msk [vmem:[%s4 + $0x48] sm:$0xff] %vm1493, %v1486
  %1504 = vst.msk [vmem:[%s4 + $0x50] sm:$0xff] %vm1493, %v1487
  %1505 = vst.msk [vmem:[%s4 + $0x58] sm:$0xff] %vm1493, %v1488
  %1506 = vst.msk [vmem:[%s4 + $0x60] sm:$0xff] %vm1493, %v1489
  %1507 = vst.msk [vmem:[%s4 + $0x68] sm:$0xff] %vm1493, %v1490
  %1508 = vst.msk [vmem:[%s4 + $0x70] sm:$0xff] %vm1493, %v1491
  %1509 = vst.msk [vmem:[%s4 + $0x78] sm:$0xff] %vm1493, %v1492
  // Predicated region
  $region18: #{tpu_custom_call.1} parent=0 // pred_check
    _
  $region19: #{tpu_custom_call.1} parent=0 // pred_check_branch
    %1511 = sbr.rel (0) target = $region21
  $region20: #{tpu_custom_call.1} parent=0 // pred_region
    _
  $region21: #{tpu_custom_call.1} parent=0 // pred_fallthru
    _
  // Predicated region
  $region22: #{tpu_custom_call.1} parent=0 // pred_check
    _
  $region23: #{tpu_custom_call.1} parent=0 // pred_check_branch
    %1513 = sbr.rel (0) target = $region25
  $region24: #{tpu_custom_call.1} parent=0 // pred_region
    _
  $region25: #{tpu_custom_call.1} parent=0 // pred_fallthru
    _

</llo_original>
